<compile_context>
chip_gen: v7x
topology: tpu7x:2x2x1
jax: 0.10.0
libtpu: 0.0.40
codegen_flags: <defaults>
</compile_context>

<pallas_src>
import functools

import jax
import jax.numpy as jnp
from jax.experimental import pallas as pl
from jax.experimental.pallas import tpu as pltpu

_LANES = 128
_SUBLANES = 8
_CHUNK_ROWS = 256                       # rows reduced per fori_loop step
_TARGET_BLOCK_BYTES = 2 * 1024 * 1024   # ~2 MiB per input block, any dtype


def _round_up(x, m):
    return ((x + m - 1) // m) * m


def _dice_partials_kernel(yp_ref, yt_ref, inter_ref, den_ref, *,
                          chunk_rows, rem_rows, nblocks, needs_mask):
    """Accumulate per-lane partial sums of p*t and p+t into (8,128) f32 outputs."""
    i = pl.program_id(0)

    @pl.when(i == 0)
    def _():
        inter_ref[...] = jnp.zeros_like(inter_ref)
        den_ref[...] = jnp.zeros_like(den_ref)

    tile_rows = yp_ref.shape[0]
    groups = chunk_rows // _SUBLANES

    def accumulate(masked, n_chunks):
        def body(j, carry):
            inter_acc, den_acc = carry
            r0 = pl.multiple_of(j * chunk_rows, chunk_rows)
            yp = yp_ref[pl.ds(r0, chunk_rows), :].astype(jnp.float32)
            yt = yt_ref[pl.ds(r0, chunk_rows), :].astype(jnp.float32)
            prod = yp * yt
            ssum = yp + yt
            if masked:
                # Only the single ragged last block traces this path.
                row = jax.lax.broadcasted_iota(
                    jnp.int32, (chunk_rows, _LANES), 0) + r0
                keep = row < rem_rows
                prod = jnp.where(keep, prod, 0.0)
                ssum = jnp.where(keep, ssum, 0.0)
            # (C,128)->(C/8,8,128) is a vreg relabeling; sum(axis=0) is VPU adds.
            inter_acc = inter_acc + jnp.sum(
                prod.reshape(groups, _SUBLANES, _LANES), axis=0)
            den_acc = den_acc + jnp.sum(
                ssum.reshape(groups, _SUBLANES, _LANES), axis=0)
            return inter_acc, den_acc

        zeros = jnp.zeros((_SUBLANES, _LANES), jnp.float32)
        inter_acc, den_acc = jax.lax.fori_loop(0, n_chunks, body, (zeros, zeros))
        inter_ref[...] += inter_acc
        den_ref[...] += den_acc

    n_full_chunks = tile_rows // chunk_rows
    n_masked_chunks = pl.cdiv(rem_rows, chunk_rows)

    if not needs_mask:
        accumulate(False, n_full_chunks)
    elif nblocks == 1:
        accumulate(True, n_masked_chunks)
    else:
        is_last = i == nblocks - 1
        pl.when(jnp.logical_not(is_last))(
            lambda: accumulate(False, n_full_chunks))
        pl.when(is_last)(
            lambda: accumulate(True, n_masked_chunks))


def dice_loss(y_pred, y_true, smooth=1e-05):
    """Pallas implementation of DiceLoss.forward. Returns a float32 scalar."""
    # Flatten only; keep the native dtype in HBM (bandwidth-bound kernel).
    # bool is 1 byte in HBM and is cast in-kernel; no wrapper astype pass.
    yp = jnp.ravel(y_pred)
    yt = jnp.ravel(y_true)
    n = yp.shape[0]
    n_main = (n // _LANES) * _LANES

    intersection = jnp.float32(0.0)
    denom = jnp.float32(0.0)

    if n_main > 0:
        rows = n_main // _LANES
        isz_p = jnp.dtype(yp.dtype).itemsize
        isz_t = jnp.dtype(yt.dtype).itemsize
        max_isz = max(isz_p, isz_t)
        min_isz = min(isz_p, isz_t)
        sub_mult = max(_SUBLANES, 32 // min_isz)        # dtype-native sublane mult
        target_rows = max(_CHUNK_ROWS,
                          _TARGET_BLOCK_BYTES // (_LANES * max_isz))

        rows_aligned = _round_up(rows, sub_mult)
        if rows_aligned <= _CHUNK_ROWS:
            tile_rows = rows_aligned
            chunk_rows = tile_rows
        else:
            tile_rows = min(target_rows, _round_up(rows, _CHUNK_ROWS))
            chunk_rows = _CHUNK_ROWS

        nblocks = pl.cdiv(rows, tile_rows)
        rem_rows = rows - (nblocks - 1) * tile_rows      # valid rows in last block
        needs_mask = rem_rows != tile_rows

        if n_main != n:
            # TODO(synk): this prefix slice copies both tensors once (only when
            # numel % 128 != 0); avoiding it needs a manual-DMA 1-D kernel.
            yp_main, yt_main = yp[:n_main], yt[:n_main]
        else:
            yp_main, yt_main = yp, yt                    # zero-copy reshape below
        yp2 = yp_main.reshape(rows, _LANES)
        yt2 = yt_main.reshape(rows, _LANES)

        kernel = functools.partial(
            _dice_partials_kernel,
            chunk_rows=chunk_rows,
            rem_rows=rem_rows,
            nblocks=nblocks,
            needs_mask=needs_mask,
        )

        inter_p, den_p = pl.pallas_call(
            kernel,
            out_shape=(
                jax.ShapeDtypeStruct((_SUBLANES, _LANES), jnp.float32),
                jax.ShapeDtypeStruct((_SUBLANES, _LANES), jnp.float32),
            ),
            grid_spec=pltpu.PrefetchScalarGridSpec(
                num_scalar_prefetch=0,
                grid=(nblocks,),
                in_specs=[
                    pl.BlockSpec((tile_rows, _LANES), lambda i: (i, 0)),
                    pl.BlockSpec((tile_rows, _LANES), lambda i: (i, 0)),
                ],
                out_specs=(
                    pl.BlockSpec((_SUBLANES, _LANES), lambda i: (0, 0)),
                    pl.BlockSpec((_SUBLANES, _LANES), lambda i: (0, 0)),
                ),
            ),
            compiler_params=pltpu.CompilerParams(
                dimension_semantics=("arbitrary",),
                vmem_limit_bytes=32 * 1024 * 1024,   # 2 inputs x 2 bufs x 2 MiB << 32 MiB
            ),
        )(yp2, yt2)

        # Tiny finalize: single cross-lane reduce of the (8,128) partials.
        intersection = jnp.sum(inter_p, dtype=jnp.float32)
        denom = jnp.sum(den_p, dtype=jnp.float32)

    if n_main != n:
        # <=127-element tail folded in plain JAX (negligible work, no padding copy).
        tp = yp[n_main:].astype(jnp.float32)
        tt = yt[n_main:].astype(jnp.float32)
        intersection = intersection + jnp.sum(tp * tt)
        denom = denom + jnp.sum(tp + tt)

    smooth = jnp.float32(smooth)
    dice = (2.0 * intersection + smooth) / (denom + smooth)
    return jnp.float32(1.0) - dice


def _reference(y_pred, y_true, smooth=1e-05):
    yp = jnp.ravel(y_pred).astype(jnp.float32)
    yt = jnp.ravel(y_true).astype(jnp.float32)
    inter = jnp.sum(yp * yt)
    return 1.0 - (2.0 * inter + smooth) / (jnp.sum(yp) + jnp.sum(yt) + smooth)


if __name__ == "__main__":
    key = jax.random.PRNGKey(0)
    k1, k2, k3, k4, k5, k6 = jax.random.split(key, 6)

    # Primary test: NCHW-shaped prediction/target as PyTorch would pass them.
    y_pred = jax.nn.sigmoid(jax.random.normal(k1, (2, 4, 16, 16), dtype=jnp.float32))
    y_true = (jax.random.uniform(k2, (2, 4, 16, 16)) > 0.5).astype(jnp.float32)
    loss = jax.block_until_ready(dice_loss(y_pred, y_true))
    ref = _reference(y_pred, y_true)
    assert jnp.allclose(loss, ref, rtol=1e-5, atol=1e-6), (loss, ref)

    # Tail path: numel % 128 != 0 (128-aligned prefix in-kernel + JAX tail).
    a = jax.random.uniform(k3, (5, 7, 31), dtype=jnp.float32)
    b = (jax.random.uniform(k4, (5, 7, 31)) > 0.5).astype(jnp.float32)
    loss2 = jax.block_until_ready(dice_loss(a, b))
    ref2 = _reference(a, b)
    assert jnp.allclose(loss2, ref2, rtol=1e-4, atol=1e-6), (loss2, ref2)

    # Multi-block path: >1 grid step, ragged (masked) last block, plus a tail.
    n_big = 4500 * 128 + 17
    c = jax.random.uniform(k5, (n_big,), dtype=jnp.float32)
    d = (jax.random.uniform(k6, (n_big,)) > 0.5).astype(jnp.float32)
    loss3 = jax.block_until_ready(dice_loss(c, d))
    ref3 = _reference(c, d)
    assert jnp.allclose(loss3, ref3, rtol=1e-4, atol=1e-6), (loss3, ref3)

    print("KERNEL_OK")
</pallas_src>

<mosaic_0001>
module attributes {stable_mosaic.version = 11 : i64} {
  func.func @_dice_partials_kernel(%arg0: i32, %arg1: memref<16x128xf32, #tpu.memory_space<vmem>>, %arg2: memref<16x128xf32, #tpu.memory_space<vmem>>, %arg3: memref<8x128xf32, #tpu.memory_space<vmem>>, %arg4: memref<8x128xf32, #tpu.memory_space<vmem>>) attributes {dimension_semantics = [#tpu.dimension_semantics<arbitrary>], iteration_bounds = array<i64: 1>, scalar_prefetch = 0 : i64, scratch_operands = 0 : i64, tpu.core_type = #tpu.core_type<tc>, window_params = [{transform_indices = @transform_0, window_bounds = array<i64: 16, 128>}, {transform_indices = @transform_1, window_bounds = array<i64: 16, 128>}, {pipeline_mode = #tpu.pipeline_mode<synchronous>, transform_indices = @transform_2, window_bounds = array<i64: 8, 128>}, {pipeline_mode = #tpu.pipeline_mode<synchronous>, transform_indices = @transform_3, window_bounds = array<i64: 8, 128>}]} {
    %c0_i32 = arith.constant 0 : i32
    %0 = arith.cmpi eq, %arg0, %c0_i32 : i32
    %1 = arith.extui %0 : i1 to i32
    %c0_i32_0 = arith.constant 0 : i32
    %2 = arith.cmpi ne, %1, %c0_i32_0 : i32
    scf.if %2 {
      %cst_13 = arith.constant 0.000000e+00 : f32
      %24 = vector.broadcast %cst_13 : f32 to vector<8x128xf32>
      %c0_14 = arith.constant 0 : index
      %c0_15 = arith.constant 0 : index
      %25 = vector.load %arg3[%c0_14, %c0_15] : memref<8x128xf32, #tpu.memory_space<vmem>>, vector<8x128xf32>
      tpu.vector_store %arg3[%c0_14, %c0_15], %24 {strides = array<i32>} : memref<8x128xf32, #tpu.memory_space<vmem>>, vector<8x128xf32>,
      %cst_16 = arith.constant 0.000000e+00 : f32
      %26 = vector.broadcast %cst_16 : f32 to vector<8x128xf32>
      %c0_17 = arith.constant 0 : index
      %c0_18 = arith.constant 0 : index
      %27 = vector.load %arg4[%c0_17, %c0_18] : memref<8x128xf32, #tpu.memory_space<vmem>>, vector<8x128xf32>
      tpu.vector_store %arg4[%c0_17, %c0_18], %26 {strides = array<i32>} : memref<8x128xf32, #tpu.memory_space<vmem>>, vector<8x128xf32>,
    } else {
    }
    %cst = arith.constant 0.000000e+00 : f32
    %3 = vector.broadcast %cst : f32 to vector<8x128xf32>
    %c0_i32_1 = arith.constant 0 : i32
    %c16_i32 = arith.constant 16 : i32
    %4 = arith.muli %c0_i32_1, %c16_i32 : i32
    %5 = tpu.assume_multiple %4, 16 : i32
    %6 = arith.index_cast %5 : i32 to index
    %c0 = arith.constant 0 : index
    %7 = vector.load %arg1[%6, %c0] : memref<16x128xf32, #tpu.memory_space<vmem>>, vector<16x128xf32>
    %8 = arith.index_cast %5 : i32 to index
    %c0_2 = arith.constant 0 : index
    %9 = vector.load %arg2[%8, %c0_2] : memref<16x128xf32, #tpu.memory_space<vmem>>, vector<16x128xf32>
    %10 = arith.mulf %7, %9 : vector<16x128xf32>
    %11 = arith.addf %7, %9 : vector<16x128xf32>
    %12 = vector.shape_cast %10 : vector<16x128xf32> to vector<2x8x128xf32>
    %cst_3 = arith.constant dense<0.000000e+00> : vector<8x128xf32>
    %13 = vector.multi_reduction <add>, %12, %cst_3 [0] : vector<2x8x128xf32> to vector<8x128xf32>
    %14 = arith.addf %3, %13 : vector<8x128xf32>
    %15 = vector.shape_cast %11 : vector<16x128xf32> to vector<2x8x128xf32>
    %cst_4 = arith.constant dense<0.000000e+00> : vector<8x128xf32>
    %16 = vector.multi_reduction <add>, %15, %cst_4 [0] : vector<2x8x128xf32> to vector<8x128xf32>
    %17 = arith.addf %3, %16 : vector<8x128xf32>
    %c1_i32 = arith.constant 1 : i32
    %c0_5 = arith.constant 0 : index
    %c0_6 = arith.constant 0 : index
    %18 = vector.load %arg3[%c0_5, %c0_6] : memref<8x128xf32, #tpu.memory_space<vmem>>, vector<8x128xf32>
    %19 = arith.addf %18, %14 : vector<8x128xf32>
    %c0_7 = arith.constant 0 : index
    %c0_8 = arith.constant 0 : index
    %20 = vector.load %arg3[%c0_7, %c0_8] : memref<8x128xf32, #tpu.memory_space<vmem>>, vector<8x128xf32>
    tpu.vector_store %arg3[%c0_7, %c0_8], %19 {strides = array<i32>} : memref<8x128xf32, #tpu.memory_space<vmem>>, vector<8x128xf32>,
    %c0_9 = arith.constant 0 : index
    %c0_10 = arith.constant 0 : index
    %21 = vector.load %arg4[%c0_9, %c0_10] : memref<8x128xf32, #tpu.memory_space<vmem>>, vector<8x128xf32>
    %22 = arith.addf %21, %17 : vector<8x128xf32>
    %c0_11 = arith.constant 0 : index
    %c0_12 = arith.constant 0 : index
    %23 = vector.load %arg4[%c0_11, %c0_12] : memref<8x128xf32, #tpu.memory_space<vmem>>, vector<8x128xf32>
    tpu.vector_store %arg4[%c0_11, %c0_12], %22 {strides = array<i32>} : memref<8x128xf32, #tpu.memory_space<vmem>>, vector<8x128xf32>,
    return
  }
  func.func @transform_0(%arg0: i32) -> (i32, i32) {
    %c0_i32 = arith.constant 0 : i32
    %c0_i32_0 = arith.constant 0 : i32
    return %arg0, %c0_i32 : i32, i32
  }
  func.func @transform_1(%arg0: i32) -> (i32, i32) {
    %c0_i32 = arith.constant 0 : i32
    %c0_i32_0 = arith.constant 0 : i32
    return %arg0, %c0_i32 : i32, i32
  }
  func.func @transform_2(%arg0: i32) -> (i32, i32) {
    %c0_i32 = arith.constant 0 : i32
    %c0_i32_0 = arith.constant 0 : i32
    %c0_i32_1 = arith.constant 0 : i32
    return %c0_i32, %c0_i32_0 : i32, i32
  }
  func.func @transform_3(%arg0: i32) -> (i32, i32) {
    %c0_i32 = arith.constant 0 : i32
    %c0_i32_0 = arith.constant 0 : i32
    %c0_i32_1 = arith.constant 0 : i32
    return %c0_i32, %c0_i32_0 : i32, i32
  }
}

</mosaic_0001>

<llo_original>
// kernel: tpu_custom_call.1
$region0: #{tpu_custom_call.1}
  #allocation0 [shape = 'u32[]', space=smem, size = 0x4, offset = 0x4, fixed_abs, tag = 'smem constant byte address 0x4 - core index']
  #allocation1 [shape = 'u32[144,128]{1,0:T(1,128)}', space=vmem, size = 0x12000, scoped, tag = 'internal scratch']
  %s0 = inlined_call_operand.hbm [shape: f32[16,128], index: 0, kind: input, shape index: {}]
  %s1 = inlined_call_operand.hbm [shape: f32[16,128], index: 1, kind: input, shape index: {}]
  %s2 = inlined_call_operand.hbm [shape: f32[8,128], index: 2, kind: output, shape index: {0}]
  %s3 = inlined_call_operand.hbm [shape: f32[8,128], index: 3, kind: output, shape index: {1}]
  %4 = xla_tuple %s2, %s3
  %s5 = sld [smem:[#allocation0]]
  $region38: #{tpu_custom_call.1} parent=0
    _
  %s7 = ssub.s32 1, %s5
  %s8 = scalar_select 0, %s7, %s5
  $region1: #{tpu_custom_call.1} parent=0
    #allocation2 [shape = 'u8[8192]{0}', space=vmem, size = 0x2000, scoped, tag = 'input window, operand 0, single buffered']
    #allocation3 [shape = 's32[1]{0}', space=sflag, size = 0x4, scoped, tag = 'scoped memory for tpu_custom_call.1']
    #allocation4 [shape = 's32[1]{0}', space=sflag, size = 0x4, scoped, tag = 'scoped memory for tpu_custom_call.1']
    #allocation5 [shape = 'u8[8192]{0}', space=vmem, size = 0x2000, scoped, tag = 'input window, operand 1, single buffered']
    #allocation6 [shape = 's32[1]{0}', space=sflag, size = 0x4, scoped, tag = 'scoped memory for tpu_custom_call.1']
    #allocation7 [shape = 'u8[4096]{0}', space=vmem, size = 0x1000, scoped, tag = 'output window, operand 0, single buffered']
    #allocation8 [shape = 'u8[4096]{0}', space=vmem, size = 0x1000, scoped, tag = 'output window, operand 1, single buffered']
    #allocation9 [shape = 's32[1]{0}', space=sflag, size = 0x4, scoped, tag = 'scoped memory for tpu_custom_call.1']
    %9 = vsyncpa [#allocation3], 0
    %10 = vsyncpa [#allocation6], 0
    %11 = vsyncpa [#allocation4], 0
    %12 = vsyncpa [#allocation9], 0
    // Predicated region
    $region2: #{tpu_custom_call.1} parent=1 // pred_check
      _
    $region3: #{tpu_custom_call.1} parent=1 // pred_check_branch
      %14 = sbr.rel (0) target = $region5
    $region4: #{tpu_custom_call.1} parent=1 // pred_region
      %s16 = ssub.s32 256, 256
      %17 = vsyncadd [#allocation3], %s16
      %s18 = sshll.u32 [#allocation2], 4
      %s19 = int_to_ptr.vmem [resolvable:$true] %s18
      %24 = dma.hbm_to_vmem [thread:$0]  %s0, 256, %s19, [#allocation3], 128, 128, 8
    $region5: #{tpu_custom_call.1} parent=1 // pred_fallthru
      _
    // Predicated region
    $region6: #{tpu_custom_call.1} parent=1 // pred_check
      _
    $region7: #{tpu_custom_call.1} parent=1 // pred_check_branch
      %26 = sbr.rel (0) target = $region9
    $region8: #{tpu_custom_call.1} parent=1 // pred_region
      %s28 = ssub.s32 256, 256
      %29 = vsyncadd [#allocation6], %s28
      %s30 = sshll.u32 [#allocation5], 4
      %s31 = int_to_ptr.vmem [resolvable:$true] %s30
      %36 = dma.hbm_to_vmem [thread:$0]  %s1, 256, %s31, [#allocation6], 128, 128, 8
    $region9: #{tpu_custom_call.1} parent=1 // pred_fallthru
      _
    // Predicated region
    $region10: #{tpu_custom_call.1} parent=1 // pred_check
      _
    $region11: #{tpu_custom_call.1} parent=1 // pred_check_branch
      %38 = sbr.rel (0) target = $region13
    $region12: #{tpu_custom_call.1} parent=1 // pred_region
      %39 = dma.done [#allocation3], 256
    $region13: #{tpu_custom_call.1} parent=1 // pred_fallthru
      _
    // Predicated region
    $region14: #{tpu_custom_call.1} parent=1 // pred_check
      _
    $region15: #{tpu_custom_call.1} parent=1 // pred_check_branch
      %41 = sbr.rel (0) target = $region17
    $region16: #{tpu_custom_call.1} parent=1 // pred_region
      %42 = dma.done [#allocation6], 256
    $region17: #{tpu_custom_call.1} parent=1 // pred_fallthru
      _
    %p43 = scmp.eq.s32.totalorder 0, 0
    // Predicated region
    $region18: #{tpu_custom_call.1} parent=1 // pred_check
      %p44 = pneg %p43
    $region19: #{tpu_custom_call.1} parent=1 // pred_check_branch
      %46 = sbr.rel (%p44) target = $region21
    $region20: #{tpu_custom_call.1} parent=1 // pred_region
      %47 = vst [vmem:[#allocation7] sm:$0xff] 0.0
      %48 = vst [vmem:[#allocation8] sm:$0xff] 0.0
    $region21: #{tpu_custom_call.1} parent=1 // pred_fallthru
      _
    %v49 = vld [vmem:[#allocation2] sm:$0xff]
    %v50 = vld [vmem:[#allocation2 + $0x8] sm:$0xff]
    %v51 = vld [vmem:[#allocation5] sm:$0xff]
    %v52 = vld [vmem:[#allocation5 + $0x8] sm:$0xff]
    %v53 = vmul.f32 %v49, %v51
    %v54 = vmul.f32 %v50, %v52
    %v55 = vadd.f32 %v49, %v51
    %v56 = vadd.f32 %v50, %v52
    %v57 = vadd.f32 %v53, %v54
    %v58 = vadd.f32 %v57, 0.0
    %v59 = vadd.f32 %v55, %v56
    %v60 = vadd.f32 %v59, 0.0
    %v61 = vld [vmem:[#allocation7] sm:$0xff]
    %v62 = vadd.f32 %v61, %v58
    %63 = vst [vmem:[#allocation7] sm:$0xff] %v62
    %v64 = vld [vmem:[#allocation8] sm:$0xff]
    %v65 = vadd.f32 %v64, %v60
    %66 = vst [vmem:[#allocation8] sm:$0xff] %v65
    // Predicated region
    $region22: #{tpu_custom_call.1} parent=1 // pred_check
      _
    $region23: #{tpu_custom_call.1} parent=1 // pred_check_branch
      %68 = sbr.rel (0) target = $region25
    $region24: #{tpu_custom_call.1} parent=1 // pred_region
      %s70 = ssub.s32 128, 128
      %71 = vsyncadd [#allocation4], %s70
      %s73 = sshll.u32 [#allocation7], 4
      %s74 = int_to_ptr.vmem [resolvable:$true] %s73
      %76 = dma.vmem_to_hbm [thread:$0]  %s74, 128, %s2, [#allocation4]
    $region25: #{tpu_custom_call.1} parent=1 // pred_fallthru
      _
    // Predicated region
    $region26: #{tpu_custom_call.1} parent=1 // pred_check
      _
    $region27: #{tpu_custom_call.1} parent=1 // pred_check_branch
      %78 = sbr.rel (0) target = $region29
    $region28: #{tpu_custom_call.1} parent=1 // pred_region
      %s80 = ssub.s32 128, 128
      %81 = vsyncadd [#allocation9], %s80
      %s83 = sshll.u32 [#allocation8], 4
      %s84 = int_to_ptr.vmem [resolvable:$true] %s83
      %86 = dma.vmem_to_hbm [thread:$0]  %s84, 128, %s3, [#allocation9]
    $region29: #{tpu_custom_call.1} parent=1 // pred_fallthru
      _
    // Predicated region
    $region30: #{tpu_custom_call.1} parent=1 // pred_check
      _
    $region31: #{tpu_custom_call.1} parent=1 // pred_check_branch
      %88 = sbr.rel (0) target = $region33
    $region32: #{tpu_custom_call.1} parent=1 // pred_region
      %89 = dma.done [#allocation4], 128
    $region33: #{tpu_custom_call.1} parent=1 // pred_fallthru
      _
    // Predicated region
    $region34: #{tpu_custom_call.1} parent=1 // pred_check
      _
    $region35: #{tpu_custom_call.1} parent=1 // pred_check_branch
      %91 = sbr.rel (0) target = $region37
    $region36: #{tpu_custom_call.1} parent=1 // pred_region
      %92 = dma.done [#allocation9], 128
    $region37: #{tpu_custom_call.1} parent=1 // pred_fallthru
      _
    %93 = vsyncpa [#allocation3], 1
    %94 = vsyncpa [#allocation6], 1
    %95 = vsyncpa [#allocation4], 1
    %96 = vsyncpa [#allocation9], 1

</llo_original>
